<compile_context>
chip_gen: v7x
topology: tpu7x:2x2x1
jax: 0.10.0
libtpu: 0.0.40
codegen_flags: <defaults>
</compile_context>

<pallas_src>
import jax
import jax.numpy as jnp
from jax.experimental import pallas as pl
from jax.experimental.pallas import tpu as pltpu

# ----------------------------------------------------------------------------
# Model hyper-parameters (module defaults: dim_nodes=256, dim_edges=128).
# ----------------------------------------------------------------------------
DIM_NODES = 256
DIM_EDGES = 128
NUM_RBF = 8
RBF_MIN, RBF_MAX = 2.0, 22.0
INV_SIGMA = float(NUM_RBF) / (RBF_MAX - RBF_MIN)

NODE_FEAT_DIM = 14                    # 4 log-lengths + 4 cos-angles + 3x(cos,sin)
NODE_FEAT_PAD = 16                    # sublane-friendly pad of the K dim

NUM_RBF_COLS = 16 * NUM_RBF           # 128 = 16 atom pairs x 8 centers (lane dense)
EDGE_EXT_COLS = 16                    # 3 dir + 9 rot + 3 chain + 1 zero pad
EDGE_FEAT_PAD = NUM_RBF_COLS + EDGE_EXT_COLS   # 144 (K of the fused matmul)

# Packed per-residue channel layout of G (channels on lanes):
#   [_CO:+48]  atom coords, "outer repeat": col 12a+3c+d = atom_a coord d
#   [_CI:+48]  atom coords, "inner tile"  : col 12k+3c+d = atom_c coord d
#   [_FO:+27]  frame vecs,  "outer repeat": col  9a+3c+d = e_a coord d
#   [_FI:+27]  frame vecs,  "inner tile"  : col  9k+3c+d = e_c coord d
#   [_FR:+9]   frame vecs e1,e2,e3 (a outer, d inner)
#   [_CH]      chain id (float)
#   [_RI]      residue index (float)
#   [_MK]      mask_i
_CO = 0
_CI = 48
_FO = 96
_FI = 123
_FR = 150
_CH = 159
_RI = 160
_MK = 161
_G_USED = 162
G_CHANNELS = 168                      # padded to a multiple of 8


# ----------------------------------------------------------------------------
# Pallas kernels
# ----------------------------------------------------------------------------
def _make_edge_kernel(has_aux, has_umask):
    """Edge featurization + fused linear embedding for one (b, i-tile, j-tile)."""

    def kernel(gi_ref, gj_ref, mu_ref, r48_ref, r27_ref, r9_ref, w_ref, b_ref,
               *rest):
        k = 0
        umask_ref = None
        aux_ref = None
        if has_umask:
            umask_ref = rest[k]
            k += 1
        if has_aux:
            aux_ref = rest[k]
            k += 1
        out_ref = rest[k]

        gi = gi_ref[0]                            # (TI, G_CHANNELS)
        gj = gj_ref[0]                            # (TJ, G_CHANNELS)
        ti = gi.shape[0]
        tj = gj.shape[0]
        m = ti * tj
        de = out_ref.shape[3]

        # --- pairwise products, edge rows on sublanes (widths 48 / 27 / 9) ---
        diff = gi[:, None, _CO:_CO + 48] - gj[None, :, _CI:_CI + 48]
        d2sq = (diff * diff).reshape(m, 48)
        pf = (gi[:, None, _FO:_FO + 27] * gj[None, :, _FI:_FI + 27]).reshape(m, 27)

        # CA_j - CA_i per edge (exact zero on self edges), dotted with frame_i.
        dca = gj[None, :, _CI + 3:_CI + 6] - gi[:, None, _CO + 12:_CO + 15]
        dca3 = jnp.concatenate([dca, dca, dca], axis=-1)          # (TI,TJ,9)
        pd = (gi[:, None, _FR:_FR + 9] * dca3).reshape(m, 9)

        # --- group-of-3 reductions on the MXU (replace narrow axis=-1 sums) ---
        d2 = jnp.dot(d2sq, r48_ref[...], preferred_element_type=jnp.float32)   # (m,16)
        rot = jnp.dot(pf, r27_ref[...], preferred_element_type=jnp.float32)    # (m,9)
        edca = jnp.dot(pd, r9_ref[...], preferred_element_type=jnp.float32)    # (m,3)

        # --- 'distances_2mer' (approx): all 16 RBFs with ONE lane-dense exp ---
        dist = jnp.sqrt(d2 + 1e-8)                                # (m,16)
        dist_rep = jnp.concatenate([dist] * NUM_RBF, axis=-1)     # (m,128)
        z = (dist_rep - mu_ref[...]) * INV_SIGMA
        rbf = jnp.exp(-(z * z))                                   # (m,128)

        # --- 'orientations_2mer' (approx): CA_j direction in frame_i + R_iR_j^T
        inv_dca = jax.lax.rsqrt(d2[:, 5:6] + 1e-8)                # CA-CA pair = 5
        dirf = edca * inv_dca                                     # (m,3)

        # --- 'distances_chain' (approx): same-chain / sequence separation ---
        same = (jnp.abs(gi[:, None, _CH:_CH + 1] - gj[None, :, _CH:_CH + 1])
                < 0.5).astype(jnp.float32).reshape(m, 1)
        ds = (gj[None, :, _RI:_RI + 1] - gi[:, None, _RI:_RI + 1]).reshape(m, 1)
        ex = jnp.concatenate(
            [dirf, rot, same, same * jnp.tanh(ds * (1.0 / 16.0)),
             same * jnp.log1p(jnp.abs(ds)),
             jnp.zeros((m, 1), jnp.float32)], axis=-1)            # (m,16)

        # --- fused edge embedding on the MXU: K = 128 + 16 = 144 ---
        w = w_ref[...]
        emb = (jnp.dot(rbf, w[:NUM_RBF_COLS], preferred_element_type=jnp.float32)
               + jnp.dot(ex, w[NUM_RBF_COLS:], preferred_element_type=jnp.float32)
               + b_ref[...])
        emb = emb.reshape(ti, tj, de)

        # edge_h = mask_ij * (embedded_features [+ edge_h_aux])
        mij = gi[:, None, _MK:_MK + 1] * gj[None, :, _MK:_MK + 1]  # (ti,tj,1)
        if has_umask:
            mij = mij * umask_ref[0]
        if has_aux:
            emb = emb + aux_ref[0]
        out_ref[...] = (mij * emb)[None]

    return kernel


def _node_kernel(feat_ref, mask_ref, aux_ref, w_ref, b_ref, out_ref):
    """Node feature embedding for one batch element."""
    f = feat_ref[0]                                   # (N, NODE_FEAT_PAD)
    h = jnp.dot(f, w_ref[...], preferred_element_type=jnp.float32) + b_ref[...]
    m = mask_ref[0]                                   # (N, 1)
    # node_h = mask_i * (embedded_features + node_h_aux)
    out_ref[...] = (m * (h + aux_ref[0]))[None]


# ----------------------------------------------------------------------------
# pallas_call wrappers
# ----------------------------------------------------------------------------
def _pick_tile(n, candidates):
    for t in candidates:
        if n % t == 0:
            return t
    return n


def _edge_pallas(G, mu_row, R48, R27, R9, W_e, b_e, umask, aux, *, tile_i, tile_j):
    B, N, Cg = G.shape
    De = W_e.shape[1]
    assert N % tile_i == 0 and (tile_i % 8 == 0 or tile_i == N)
    assert N % tile_j == 0 and (tile_j % 128 == 0 or tile_j == N)
    grid = (B, N // tile_i, N // tile_j)

    in_specs = [
        pl.BlockSpec((1, tile_i, Cg), lambda bb, ii, jj: (bb, ii, 0)),   # i-tile of G
        pl.BlockSpec((1, tile_j, Cg), lambda bb, ii, jj: (bb, jj, 0)),   # j-tile of G
        pl.BlockSpec((1, NUM_RBF_COLS), lambda bb, ii, jj: (0, 0)),      # rbf centers
        pl.BlockSpec((48, 16), lambda bb, ii, jj: (0, 0)),               # group-sum mats
        pl.BlockSpec((27, 9), lambda bb, ii, jj: (0, 0)),
        pl.BlockSpec((9, 3), lambda bb, ii, jj: (0, 0)),
        pl.BlockSpec((EDGE_FEAT_PAD, De), lambda bb, ii, jj: (0, 0)),    # W_edge
        pl.BlockSpec((1, De), lambda bb, ii, jj: (0, 0)),                # b_edge
    ]
    args = [G, G, mu_row, R48, R27, R9, W_e, b_e]
    if umask is not None:
        in_specs.append(
            pl.BlockSpec((1, tile_i, tile_j, 1), lambda bb, ii, jj: (bb, ii, jj, 0)))
        args.append(umask)
    if aux is not None:
        in_specs.append(
            pl.BlockSpec((1, tile_i, tile_j, De), lambda bb, ii, jj: (bb, ii, jj, 0)))
        args.append(aux)

    kernel = _make_edge_kernel(has_aux=aux is not None, has_umask=umask is not None)
    return pl.pallas_call(
        kernel,
        out_shape=jax.ShapeDtypeStruct((B, N, N, De), jnp.float32),
        grid_spec=pltpu.PrefetchScalarGridSpec(
            num_scalar_prefetch=0,
            grid=grid,
            in_specs=in_specs,
            out_specs=pl.BlockSpec((1, tile_i, tile_j, De),
                                   lambda bb, ii, jj: (bb, ii, jj, 0)),
        ),
        compiler_params=pltpu.CompilerParams(
            dimension_semantics=("parallel", "parallel", "parallel"),
            vmem_limit_bytes=64 * 1024 * 1024),
    )(*args)


def _node_pallas(feat, mask_col, aux, W_n, b_n):
    B, N, Fp = feat.shape
    Dn = W_n.shape[1]
    return pl.pallas_call(
        _node_kernel,
        out_shape=jax.ShapeDtypeStruct((B, N, Dn), jnp.float32),
        grid_spec=pltpu.PrefetchScalarGridSpec(
            num_scalar_prefetch=0,
            grid=(B,),
            in_specs=[
                pl.BlockSpec((1, N, Fp), lambda bb: (bb, 0, 0)),
                pl.BlockSpec((1, N, 1), lambda bb: (bb, 0, 0)),
                pl.BlockSpec((1, N, Dn), lambda bb: (bb, 0, 0)),
                pl.BlockSpec((Fp, Dn), lambda bb: (0, 0)),
                pl.BlockSpec((1, Dn), lambda bb: (0, 0)),
            ],
            out_specs=pl.BlockSpec((1, N, Dn), lambda bb: (bb, 0, 0)),
        ),
        compiler_params=pltpu.CompilerParams(dimension_semantics=("parallel",)),
    )(feat, mask_col, aux, W_n, b_n)


# ----------------------------------------------------------------------------
# JAX glue: O(B*N) geometry prep (frames, internal coords, packed G tensor)
# ----------------------------------------------------------------------------
def _normalize(v, eps=1e-8):
    return v * jax.lax.rsqrt(jnp.sum(v * v, axis=-1, keepdims=True) + eps)


def _cos_angle(a, b, c):
    u = _normalize(a - b)
    v = _normalize(c - b)
    return jnp.sum(u * v, axis=-1)


def _dihedral(p0, p1, p2, p3):
    b0 = p0 - p1
    b1 = _normalize(p2 - p1)
    b2 = p3 - p2
    v = b0 - jnp.sum(b0 * b1, -1, keepdims=True) * b1
    w = b2 - jnp.sum(b2 * b1, -1, keepdims=True) * b1
    x = jnp.sum(v * w, -1)
    y = jnp.sum(jnp.cross(b1, v) * w, -1)
    return jnp.arctan2(y, x + 1e-8)


def _backbone_frames(X):
    """Per-residue orthonormal frame from N, CA, C -> (B, N, 9)."""
    Nat, CA, Cat = X[..., 0, :], X[..., 1, :], X[..., 2, :]
    e1 = _normalize(Cat - CA)
    u = Nat - CA
    e2 = _normalize(u - jnp.sum(u * e1, -1, keepdims=True) * e1)
    e3 = jnp.cross(e1, e2)
    return jnp.concatenate([e1, e2, e3], axis=-1)


def _internal_coords(X):
    """'internal_coords' (log_lengths=True) style node features -> (B, N, 14)."""
    Nat, CA, Cat, O = X[..., 0, :], X[..., 1, :], X[..., 2, :], X[..., 3, :]
    N_next = jnp.roll(Nat, -1, axis=1)
    CA_next = jnp.roll(CA, -1, axis=1)
    C_prev = jnp.roll(Cat, 1, axis=1)

    def _len(a, b):
        return jnp.sqrt(jnp.sum((a - b) ** 2, -1) + 1e-8)

    log_lengths = jnp.log(jnp.stack(
        [_len(CA, Nat), _len(Cat, CA), _len(O, Cat), _len(N_next, Cat)], -1))
    angles = jnp.stack(
        [_cos_angle(Nat, CA, Cat), _cos_angle(CA, Cat, O),
         _cos_angle(CA, Cat, N_next), _cos_angle(C_prev, Nat, CA)], -1)
    phi = _dihedral(C_prev, Nat, CA, Cat)
    psi = _dihedral(Nat, CA, Cat, N_next)
    omega = _dihedral(CA, Cat, N_next, CA_next)
    dih = jnp.stack([jnp.cos(phi), jnp.sin(phi), jnp.cos(psi), jnp.sin(psi),
                     jnp.cos(omega), jnp.sin(omega)], -1)
    return jnp.concatenate([log_lengths, angles, dih], -1).astype(jnp.float32)


def _pack_residue_features(X, C, mask_i):
    """Pack per-residue geometry into the (B, N, G_CHANNELS) edge-kernel input."""
    B, N = C.shape
    coords12 = X.reshape(B, N, 12)
    frames = _backbone_frames(X)                       # (B, N, 9)
    fr3 = frames.reshape(B, N, 3, 3)
    crep_o = jnp.repeat(X, 4, axis=2).reshape(B, N, 48)
    crep_i = jnp.tile(coords12, (1, 1, 4))
    frep_o = jnp.repeat(fr3, 3, axis=2).reshape(B, N, 27)
    frep_i = jnp.tile(frames, (1, 1, 3))
    chain_f = C.astype(jnp.float32)[..., None]
    residx = jnp.broadcast_to(
        jnp.arange(N, dtype=jnp.float32)[None, :], (B, N))[..., None]
    pad = jnp.zeros((B, N, G_CHANNELS - _G_USED), jnp.float32)
    G = jnp.concatenate(
        [crep_o, crep_i, frep_o, frep_i, frames, chain_f, residx,
         mask_i[..., None], pad], axis=-1)
    assert G.shape[-1] == G_CHANNELS
    return G


def _rbf_mu_row():
    centers = jnp.linspace(RBF_MIN, RBF_MAX, NUM_RBF, dtype=jnp.float32)
    return jnp.repeat(centers, 16).reshape(1, NUM_RBF_COLS)


def _group_sum_matrix(n):
    """(3n, n) constant: sums each group of 3 consecutive input columns."""
    return (jnp.arange(3 * n)[:, None] // 3
            == jnp.arange(n)[None, :]).astype(jnp.float32)


# ----------------------------------------------------------------------------
# Parameters + forward pass
# ----------------------------------------------------------------------------
def init_params(key):
    k1, k2 = jax.random.split(key, 2)
    return {
        "W_node": jax.random.normal(k1, (NODE_FEAT_PAD, DIM_NODES), jnp.float32) * 0.1,
        "b_node": jnp.zeros((1, DIM_NODES), jnp.float32),
        "W_edge": jax.random.normal(k2, (EDGE_FEAT_PAD, DIM_EDGES), jnp.float32) * 0.1,
        "b_edge": jnp.zeros((1, DIM_EDGES), jnp.float32),
    }


def backbone_encoder_gnn(params, X, C, node_h_aux=None, edge_h_aux=None,
                         edge_idx=None, mask_ij=None, *, tile_i=None, tile_j=None):
    """Returns (node_h, edge_h, edge_idx, mask_i, mask_ij), matching the module."""
    B, N = C.shape
    X = X.astype(jnp.float32)
    if tile_i is None:
        tile_i = _pick_tile(N, (16, 8))
    if tile_j is None:
        tile_j = _pick_tile(N, (128,))

    # Reference forward overrides edge_idx with the dense all-pairs graph.
    edge_idx = jnp.broadcast_to(
        jnp.arange(N, dtype=jnp.int32)[None, None, :], (B, N, N))

    mask_i = (C > 0).astype(jnp.float32)                        # (B, N)
    mask_ij_out = mask_i[:, :, None] * mask_i[:, None, :]       # (B, N, N)
    if mask_ij is not None:
        mask_ij_out = mask_ij_out * mask_ij.astype(jnp.float32)

    # Node features (padded K) + node embedding kernel.
    node_feat = _internal_coords(X)
    node_feat = jnp.concatenate(
        [node_feat, jnp.zeros((B, N, NODE_FEAT_PAD - NODE_FEAT_DIM), jnp.float32)], -1)
    if node_h_aux is None:
        node_h_aux = jnp.zeros((B, N, DIM_NODES), jnp.float32)
    node_h = _node_pallas(node_feat, mask_i[..., None],
                          node_h_aux.astype(jnp.float32),
                          params["W_node"], params["b_node"])

    # Edge kernel inputs.
    G = _pack_residue_features(X, C, mask_i)
    mu_row = _rbf_mu_row()
    R48, R27, R9 = _group_sum_matrix(16), _group_sum_matrix(9), _group_sum_matrix(3)
    umask = None if mask_ij is None else mask_ij.astype(jnp.float32)[..., None]
    aux = None if edge_h_aux is None else edge_h_aux.astype(jnp.float32)
    edge_h = _edge_pallas(G, mu_row, R48, R27, R9,
                          params["W_edge"], params["b_edge"], umask, aux,
                          tile_i=tile_i, tile_j=tile_j)

    return node_h, edge_h, edge_idx, mask_i, mask_ij_out


# ----------------------------------------------------------------------------
# Pure-JAX references (for validation only)
# ----------------------------------------------------------------------------
def _edge_reference(X, C, mu_row, W_e, b_e, mask_full, aux):
    B, N = C.shape
    X = X.astype(jnp.float32)
    E = _backbone_frames(X).reshape(B, N, 3, 3)
    diff = X[:, :, None, :, None, :] - X[:, None, :, None, :, :]    # (B,N,N,4,4,3)
    d2 = jnp.sum(diff * diff, axis=-1).reshape(B, N, N, 16)
    dist = jnp.sqrt(d2 + 1e-8)
    z = (jnp.concatenate([dist] * NUM_RBF, -1) - mu_row.reshape(1, 1, 1, -1)) * INV_SIGMA
    rbf = jnp.exp(-(z * z))
    rot = jnp.einsum('biad,bjcd->bijac', E, E).reshape(B, N, N, 9)
    CA = X[:, :, 1, :]
    dca = CA[:, None, :, :] - CA[:, :, None, :]
    inv = jax.lax.rsqrt(jnp.sum(dca * dca, -1, keepdims=True) + 1e-8)
    dirf = jnp.einsum('biad,bijd->bija', E, dca) * inv
    chain = C.astype(jnp.float32)
    same = (jnp.abs(chain[:, :, None] - chain[:, None, :]) < 0.5
            ).astype(jnp.float32)[..., None]
    ridx = jnp.arange(N, dtype=jnp.float32)
    ds = jnp.broadcast_to((ridx[None, :] - ridx[:, None])[None, ..., None],
                          (B, N, N, 1))
    ex = jnp.concatenate([dirf, rot, same, same * jnp.tanh(ds / 16.0),
                          same * jnp.log1p(jnp.abs(ds)),
                          jnp.zeros((B, N, N, 1), jnp.float32)], -1)
    emb = (jnp.einsum('bijk,kd->bijd', rbf, W_e[:NUM_RBF_COLS])
           + jnp.einsum('bijk,kd->bijd', ex, W_e[NUM_RBF_COLS:])
           + b_e.reshape(1, 1, 1, -1))
    return mask_full[..., None] * (emb + aux)


def _node_reference(X, C, W_n, b_n, aux):
    mask_i = (C > 0).astype(jnp.float32)
    feat = _internal_coords(X)
    return mask_i[..., None] * (feat @ W_n[:NODE_FEAT_DIM] + b_n + aux)


# ----------------------------------------------------------------------------
# Demo
# ----------------------------------------------------------------------------
if __name__ == "__main__":
    key = jax.random.PRNGKey(0)
    kp, kx, kn, ke = jax.random.split(key, 4)

    B, Nres, A = 2, 16, 4
    params = init_params(kp)

    X = jax.random.normal(kx, (B, Nres, A, 3), jnp.float32) * 2.0
    chain = jnp.where(jnp.arange(Nres) < Nres // 2, 1, 2).astype(jnp.int32)
    C = jnp.broadcast_to(chain[None, :], (B, Nres))
    C = C.at[:, -1].set(0)                     # exercise masking (padded residue)
    node_h_aux = jax.random.normal(kn, (B, Nres, DIM_NODES), jnp.float32)
    edge_h_aux = jax.random.normal(ke, (B, Nres, Nres, DIM_EDGES), jnp.float32)

    # --- call 1: with auxiliary node/edge features, no user mask_ij ---
    outs = backbone_encoder_gnn(params, X, C, node_h_aux, edge_h_aux)
    outs = jax.block_until_ready(outs)
    node_h, edge_h, edge_idx, mask_i, mask_ij = outs

    assert node_h.shape == (B, Nres, DIM_NODES)
    assert edge_h.shape == (B, Nres, Nres, DIM_EDGES)
    assert edge_idx.shape == (B, Nres, Nres)
    assert mask_i.shape == (B, Nres)
    assert mask_ij.shape == (B, Nres, Nres)
    assert bool(jnp.all(jnp.isfinite(node_h))) and bool(jnp.all(jnp.isfinite(edge_h)))

    mu_row = _rbf_mu_row()
    ref_edge = _edge_reference(X, C, mu_row, params["W_edge"], params["b_edge"],
                               mask_ij, edge_h_aux)
    ref_node = _node_reference(X, C, params["W_node"], params["b_node"], node_h_aux)
    edge_err = float(jnp.max(jnp.abs(edge_h - ref_edge)))
    node_err = float(jnp.max(jnp.abs(node_h - ref_node)))
    assert edge_err < 0.1, f"edge mismatch {edge_err}"
    assert node_err < 0.05, f"node mismatch {node_err}"

    # --- call 2: no aux (no zero-aux DMA) + user-provided mask_ij path ---
    mask_u = jnp.ones((B, Nres, Nres), jnp.float32).at[:, 0, 1].set(0.0)
    outs2 = backbone_encoder_gnn(params, X, C, None, None, None, mask_u)
    outs2 = jax.block_until_ready(outs2)
    node_h2, edge_h2, _, _, mask_ij2 = outs2
    ref_mask2 = mask_i[:, :, None] * mask_i[:, None, :] * mask_u
    ref_edge2 = _edge_reference(X, C, mu_row, params["W_edge"], params["b_edge"],
                                ref_mask2, jnp.zeros_like(edge_h_aux))
    assert float(jnp.max(jnp.abs(mask_ij2 - ref_mask2))) < 1e-6
    assert float(jnp.max(jnp.abs(edge_h2 - ref_edge2))) < 0.1
    assert bool(jnp.all(jnp.isfinite(node_h2))) and bool(jnp.all(jnp.isfinite(edge_h2)))

    print("KERNEL_OK")
</pallas_src>

<mosaic_0001>
module attributes {stable_mosaic.version = 11 : i64} {
  func.func @_node_kernel(%arg0: i32, %arg1: memref<1x16x16xf32, #tpu.memory_space<vmem>>, %arg2: memref<1x16x1xf32, #tpu.memory_space<vmem>>, %arg3: memref<1x16x256xf32, #tpu.memory_space<vmem>>, %arg4: memref<16x256xf32, #tpu.memory_space<vmem>>, %arg5: memref<1x256xf32, #tpu.memory_space<vmem>>, %arg6: memref<1x16x256xf32, #tpu.memory_space<vmem>>) attributes {dimension_semantics = [#tpu.dimension_semantics<parallel>], iteration_bounds = array<i64: 2>, scalar_prefetch = 0 : i64, scratch_operands = 0 : i64, tpu.core_type = #tpu.core_type<tc>, window_params = [{transform_indices = @transform_0, window_bounds = array<i64: 1, 16, 16>}, {transform_indices = @transform_1, window_bounds = array<i64: 1, 16, 1>}, {transform_indices = @transform_2, window_bounds = array<i64: 1, 16, 256>}, {pipeline_mode = #tpu.pipeline_mode<synchronous>, transform_indices = @transform_3, window_bounds = array<i64: 16, 256>}, {pipeline_mode = #tpu.pipeline_mode<synchronous>, transform_indices = @transform_4, window_bounds = array<i64: 1, 256>}, {transform_indices = @transform_5, window_bounds = array<i64: 1, 16, 256>}]} {
    %c0 = arith.constant 0 : index
    %c0_0 = arith.constant 0 : index
    %c0_1 = arith.constant 0 : index
    %0 = vector.load %arg1[%c0, %c0_0, %c0_1] : memref<1x16x16xf32, #tpu.memory_space<vmem>>, vector<1x16x16xf32>
    %1 = vector.shape_cast %0 : vector<1x16x16xf32> to vector<16x16xf32>
    %c0_2 = arith.constant 0 : index
    %c0_3 = arith.constant 0 : index
    %2 = vector.load %arg4[%c0_2, %c0_3] : memref<16x256xf32, #tpu.memory_space<vmem>>, vector<16x256xf32>
    %cst = arith.constant dense<0.000000e+00> : vector<16x256xf32>
    %3 = tpu.matmul %1, %2, %cst {dimension_numbers = #tpu.dot_dimension_numbers<[1], [0], [0], [1], [0, 0, 1, 1], [], []>} : vector<16x16xf32>, vector<16x256xf32>, vector<16x256xf32> -> vector<16x256xf32>
    %c0_4 = arith.constant 0 : index
    %c0_5 = arith.constant 0 : index
    %4 = vector.load %arg5[%c0_4, %c0_5] : memref<1x256xf32, #tpu.memory_space<vmem>>, vector<1x256xf32>
    %5 = vector.broadcast %4 : vector<1x256xf32> to vector<16x256xf32>
    %6 = arith.addf %3, %5 : vector<16x256xf32>
    %c0_6 = arith.constant 0 : index
    %c0_7 = arith.constant 0 : index
    %c0_8 = arith.constant 0 : index
    %7 = vector.load %arg2[%c0_6, %c0_7, %c0_8] : memref<1x16x1xf32, #tpu.memory_space<vmem>>, vector<1x16x1xf32>
    %8 = vector.shape_cast %7 : vector<1x16x1xf32> to vector<16x1xf32>
    %c0_9 = arith.constant 0 : index
    %c0_10 = arith.constant 0 : index
    %c0_11 = arith.constant 0 : index
    %9 = vector.load %arg3[%c0_9, %c0_10, %c0_11] : memref<1x16x256xf32, #tpu.memory_space<vmem>>, vector<1x16x256xf32>
    %10 = vector.shape_cast %9 : vector<1x16x256xf32> to vector<16x256xf32>
    %11 = arith.addf %6, %10 : vector<16x256xf32>
    %12 = vector.broadcast %8 : vector<16x1xf32> to vector<16x256xf32>
    %13 = arith.mulf %12, %11 : vector<16x256xf32>
    %14 = vector.shape_cast %13 : vector<16x256xf32> to vector<1x16x256xf32>
    %c0_12 = arith.constant 0 : index
    %c0_13 = arith.constant 0 : index
    %c0_14 = arith.constant 0 : index
    %15 = vector.load %arg6[%c0_12, %c0_13, %c0_14] : memref<1x16x256xf32, #tpu.memory_space<vmem>>, vector<1x16x256xf32>
    tpu.vector_store %arg6[%c0_12, %c0_13, %c0_14], %14 {strides = array<i32>} : memref<1x16x256xf32, #tpu.memory_space<vmem>>, vector<1x16x256xf32>,
    return
  }
  func.func @transform_0(%arg0: i32) -> (i32, i32, i32) {
    %c0_i32 = arith.constant 0 : i32
    %c0_i32_0 = arith.constant 0 : i32
    %c0_i32_1 = arith.constant 0 : i32
    return %arg0, %c0_i32, %c0_i32_0 : i32, i32, i32
  }
  func.func @transform_1(%arg0: i32) -> (i32, i32, i32) {
    %c0_i32 = arith.constant 0 : i32
    %c0_i32_0 = arith.constant 0 : i32
    %c0_i32_1 = arith.constant 0 : i32
    return %arg0, %c0_i32, %c0_i32_0 : i32, i32, i32
  }
  func.func @transform_2(%arg0: i32) -> (i32, i32, i32) {
    %c0_i32 = arith.constant 0 : i32
    %c0_i32_0 = arith.constant 0 : i32
    %c0_i32_1 = arith.constant 0 : i32
    return %arg0, %c0_i32, %c0_i32_0 : i32, i32, i32
  }
  func.func @transform_3(%arg0: i32) -> (i32, i32) {
    %c0_i32 = arith.constant 0 : i32
    %c0_i32_0 = arith.constant 0 : i32
    %c0_i32_1 = arith.constant 0 : i32
    return %c0_i32, %c0_i32_0 : i32, i32
  }
  func.func @transform_4(%arg0: i32) -> (i32, i32) {
    %c0_i32 = arith.constant 0 : i32
    %c0_i32_0 = arith.constant 0 : i32
    %c0_i32_1 = arith.constant 0 : i32
    return %c0_i32, %c0_i32_0 : i32, i32
  }
  func.func @transform_5(%arg0: i32) -> (i32, i32, i32) {
    %c0_i32 = arith.constant 0 : i32
    %c0_i32_0 = arith.constant 0 : i32
    %c0_i32_1 = arith.constant 0 : i32
    return %arg0, %c0_i32, %c0_i32_0 : i32, i32, i32
  }
}

</mosaic_0001>

<llo_original>
// kernel: tpu_custom_call.1
$region0: #{tpu_custom_call.1}
  #allocation0 [shape = 'u32[]', space=smem, size = 0x4, offset = 0x4, fixed_abs, tag = 'smem constant byte address 0x4 - core index']
  #allocation1 [shape = 'u32[144,128]{1,0:T(1,128)}', space=vmem, size = 0x12000, scoped, tag = 'internal scratch']
  %s0 = inlined_call_operand.vmem [shape: f32[2,16,16], index: 0, kind: input, shape index: {}]
  %s1 = inlined_call_operand.vmem [shape: f32[2,16,1], index: 1, kind: input, shape index: {}]
  %s2 = inlined_call_operand.hbm [shape: f32[2,16,256], index: 2, kind: input, shape index: {}]
  %s3 = inlined_call_operand.hbm [shape: f32[16,256], index: 3, kind: input, shape index: {}]
  %s4 = inlined_call_operand.vmem [shape: f32[1,256], index: 4, kind: input, shape index: {}]
  %s5 = inlined_call_operand.hbm [shape: f32[2,16,256], index: 5, kind: output, shape index: {}]
  %s6 = sld [smem:[#allocation0]]
  $region61: #{tpu_custom_call.1} parent=0
    _
  %s8 = ssub.s32 1, %s6
  %s9 = scalar_select 0, %s8, %s6
  $region1: #{tpu_custom_call.1} parent=0
    #allocation2 [shape = 'u8[32768]{0}', space=vmem, size = 0x8000, scoped, tag = 'input window, operand 2']
    #allocation3 [shape = 's32[2]{0}', space=sflag, size = 0x8, scoped, tag = 'scoped memory for tpu_custom_call.1']
    #allocation4 [shape = 's32[2]{0}', space=sflag, size = 0x8, scoped, tag = 'scoped memory for tpu_custom_call.1']
    #allocation5 [shape = 'u8[16384]{0}', space=vmem, size = 0x4000, scoped, tag = 'input window, operand 3, single buffered']
    #allocation6 [shape = 's32[1]{0}', space=sflag, size = 0x4, scoped, tag = 'scoped memory for tpu_custom_call.1']
    #allocation7 [shape = 'u8[32768]{0}', space=vmem, size = 0x8000, scoped, tag = 'output window, operand 0']
    %10 = vsyncpa [#allocation3], 0
    %s11 = scalar_lea.sflag [#allocation3], 1
    %12 = vsyncpa %s11, 0
    %13 = vsyncpa [#allocation6], 0
    %14 = vsyncpa [#allocation4], 0
    %s15 = scalar_lea.sflag [#allocation4], 1
    %16 = vsyncpa %s15, 0
    loop: start=0, step=1, limit=4
    $region2: #{tpu_custom_call.1} parent=1 // loop_pre_header
      _
    $region3: #{tpu_custom_call.1} parent=1 // loop_header
      %s18 = sphi 0, %s22
      %p19 = scmp.ge.s32.totalorder %s18, 4
      %s28 = sphi 0, %s30
      %s31 = sphi 0, %s28
      %s32 = sphi 0, %s31
      %s48 = sphi 0, %s32
      %s54 = sphi 0, %s56
      %s57 = sphi 0, %s54
      %s58 = sphi 0, %s57
      %s74 = sphi 0, %s58
      %s80 = sphi 0, %s82
      %s83 = sphi 0, %s80
      %s84 = sphi 0, %s83
      %s100 = sphi 0, %s84
      %s104 = sphi 0, %s104
      %s106 = sphi 0, %s104
      %s107 = sphi 0, %s106
      %s121 = sphi 0, %s107
      %s125 = sphi 0, %s125
      %s127 = sphi 0, %s125
      %s128 = sphi 0, %s127
      %s142 = sphi 0, %s128
      %s148 = sphi 0, %s150
      %s151 = sphi 0, %s148
      %s152 = sphi 0, %s151
      %s168 = sphi 0, %s152
    $region4: #{tpu_custom_call.1} parent=1 // loop_header_branch
      %21 = sbr.rel (%p19) target = $region8
    $region5: #{tpu_custom_call.1} parent=1 // loop_body
      %s23 = ssub.s32 %s18, 1
      %s24 = ssub.s32 %s18, 2
      %s25 = sadd.s32 %s18, 1
      %s26 = ssub.s32 %s18, %s25
      %p27 = scmp.eq.s32.totalorder %s26, 0
      %s29 = sadd.s32 %s28, 1
      %s30 = scalar_select %p27, %s28, %s29
      %p33 = pneg %p27
      %p34 = scmp.eq.s32.totalorder %s18, 1
      %p35 = por %p33, %p34
      %p36 = scmp.ne.s32.totalorder %s28, %s31
      %p37 = scmp.eq.s32.totalorder %s18, 0
      %p38 = por %p36, %p37
      %p39 = scmp.ne.s32.totalorder %s28, %s31
      %p40 = scmp.eq.s32.totalorder %s23, 1
      %p41 = por %p39, %p40
      %p42 = scmp.ne.s32.totalorder %s31, %s32
      %p43 = scmp.eq.s32.totalorder %s23, 0
      %p44 = por %p42, %p43
      %p45 = scmp.ne.s32.totalorder %s31, %s32
      %p46 = scmp.eq.s32.totalorder %s24, 1
      %p47 = por %p45, %p46
      %p49 = scmp.ne.s32.totalorder %s32, %s48
      %p50 = scmp.eq.s32.totalorder %s24, 0
      %p51 = por %p49, %p50
      %s52 = ssub.s32 %s18, %s25
      %p53 = scmp.eq.s32.totalorder %s52, 0
      %s55 = sadd.s32 %s54, 1
      %s56 = scalar_select %p53, %s54, %s55
      %p59 = pneg %p53
      %p60 = scmp.eq.s32.totalorder %s18, 1
      %p61 = por %p59, %p60
      %p62 = scmp.ne.s32.totalorder %s54, %s57
      %p63 = scmp.eq.s32.totalorder %s18, 0
      %p64 = por %p62, %p63
      %p65 = scmp.ne.s32.totalorder %s54, %s57
      %p66 = scmp.eq.s32.totalorder %s23, 1
      %p67 = por %p65, %p66
      %p68 = scmp.ne.s32.totalorder %s57, %s58
      %p69 = scmp.eq.s32.totalorder %s23, 0
      %p70 = por %p68, %p69
      %p71 = scmp.ne.s32.totalorder %s57, %s58
      %p72 = scmp.eq.s32.totalorder %s24, 1
      %p73 = por %p71, %p72
      %p75 = scmp.ne.s32.totalorder %s58, %s74
      %p76 = scmp.eq.s32.totalorder %s24, 0
      %p77 = por %p75, %p76
      %s78 = ssub.s32 %s18, %s25
      %p79 = scmp.eq.s32.totalorder %s78, 0
      %s81 = sadd.s32 %s80, 1
      %s82 = scalar_select %p79, %s80, %s81
      %p85 = pneg %p79
      %p86 = scmp.eq.s32.totalorder %s18, 1
      %p87 = por %p85, %p86
      %p88 = scmp.ne.s32.totalorder %s80, %s83
      %p89 = scmp.eq.s32.totalorder %s18, 0
      %p90 = por %p88, %p89
      %p91 = scmp.ne.s32.totalorder %s80, %s83
      %p92 = scmp.eq.s32.totalorder %s23, 1
      %p93 = por %p91, %p92
      %p94 = scmp.ne.s32.totalorder %s83, %s84
      %p95 = scmp.eq.s32.totalorder %s23, 0
      %p96 = por %p94, %p95
      %p97 = scmp.ne.s32.totalorder %s83, %s84
      %p98 = scmp.eq.s32.totalorder %s24, 1
      %p99 = por %p97, %p98
      %p101 = scmp.ne.s32.totalorder %s84, %s100
      %p102 = scmp.eq.s32.totalorder %s24, 0
      %p103 = por %p101, %p102
      %s105 = sadd.s32 %s104, 1
      %p108 = scmp.eq.s32.totalorder %s18, 1
      %p109 = scmp.ne.s32.totalorder %s104, %s106
      %p110 = scmp.eq.s32.totalorder %s18, 0
      %p111 = por %p109, %p110
      %p112 = scmp.ne.s32.totalorder %s104, %s106
      %p113 = scmp.eq.s32.totalorder %s23, 1
      %p114 = por %p112, %p113
      %p115 = scmp.ne.s32.totalorder %s106, %s107
      %p116 = scmp.eq.s32.totalorder %s23, 0
      %p117 = por %p115, %p116
      %p118 = scmp.ne.s32.totalorder %s106, %s107
      %p119 = scmp.eq.s32.totalorder %s24, 1
      %p120 = por %p118, %p119
      %p122 = scmp.ne.s32.totalorder %s107, %s121
      %p123 = scmp.eq.s32.totalorder %s24, 0
      %p124 = por %p122, %p123
      %s126 = sadd.s32 %s125, 1
      %p129 = scmp.eq.s32.totalorder %s18, 1
      %p130 = scmp.ne.s32.totalorder %s125, %s127
      %p131 = scmp.eq.s32.totalorder %s18, 0
      %p132 = por %p130, %p131
      %p133 = scmp.ne.s32.totalorder %s125, %s127
      %p134 = scmp.eq.s32.totalorder %s23, 1
      %p135 = por %p133, %p134
      %p136 = scmp.ne.s32.totalorder %s127, %s128
      %p137 = scmp.eq.s32.totalorder %s23, 0
      %p138 = por %p136, %p137
      %p139 = scmp.ne.s32.totalorder %s127, %s128
      %p140 = scmp.eq.s32.totalorder %s24, 1
      %p141 = por %p139, %p140
      %p143 = scmp.ne.s32.totalorder %s128, %s142
      %p144 = scmp.eq.s32.totalorder %s24, 0
      %p145 = por %p143, %p144
      %s146 = ssub.s32 %s18, %s25
      %p147 = scmp.eq.s32.totalorder %s146, 0
      %s149 = sadd.s32 %s148, 1
      %s150 = scalar_select %p147, %s148, %s149
      %p153 = pneg %p147
      %p154 = scmp.eq.s32.totalorder %s18, 1
      %p155 = por %p153, %p154
      %p156 = scmp.ne.s32.totalorder %s148, %s151
      %p157 = scmp.eq.s32.totalorder %s18, 0
      %p158 = por %p156, %p157
      %p159 = scmp.ne.s32.totalorder %s148, %s151
      %p160 = scmp.eq.s32.totalorder %s23, 1
      %p161 = por %p159, %p160
      %p162 = scmp.ne.s32.totalorder %s151, %s152
      %p163 = scmp.eq.s32.totalorder %s23, 0
      %p164 = por %p162, %p163
      %p165 = scmp.ne.s32.totalorder %s151, %s152
      %p166 = scmp.eq.s32.totalorder %s24, 1
      %p167 = por %p165, %p166
      %p169 = scmp.ne.s32.totalorder %s152, %s168
      %p170 = scmp.eq.s32.totalorder %s24, 0
      %p171 = por %p169, %p170
      %p172 = scmp.le.s32.totalorder 1, %s18
      %p173 = scmp.lt.s32.totalorder %s18, 3
      %p174 = pnand %p172, %p173
      %p175 = pneg %p174
      // Predicated region
      $region9: #{tpu_custom_call.1} parent=5 // pred_check
        _
      $region10: #{tpu_custom_call.1} parent=5 // pred_check_branch
        %177 = sbr.rel (%p174) target = $region12
      $region11: #{tpu_custom_call.1} parent=5 // pred_region
        %s178 = ssub.s32 %s18, 1
        // Predicated region
        $region13: #{tpu_custom_call.1} parent=11 // pred_check
          %p179 = pneg %p117
        $region14: #{tpu_custom_call.1} parent=11 // pred_check_branch
          %181 = sbr.rel (%p179) target = $region16
        $region15: #{tpu_custom_call.1} parent=11 // pred_region
          %s183 = ssub.s32 512, 512
          %184 = vsyncadd [#allocation6], %s183
          %s185 = sshll.u32 [#allocation5], 4
          %s186 = int_to_ptr.vmem [resolvable:$true] %s185
          %191 = dma.hbm_to_vmem [thread:$0]  %s3, 512, %s186, [#allocation6], 256, 256, 16
        $region16: #{tpu_custom_call.1} parent=11 // pred_fallthru
          _
        // Predicated region
        $region17: #{tpu_custom_call.1} parent=11 // pred_check
          %p192 = pneg %p138
        $region18: #{tpu_custom_call.1} parent=11 // pred_check_branch
          %194 = sbr.rel (%p192) target = $region20
        $region19: #{tpu_custom_call.1} parent=11 // pred_region
          _
        $region20: #{tpu_custom_call.1} parent=11 // pred_fallthru
          _
      $region12: #{tpu_custom_call.1} parent=5 // pred_fallthru
        _
      %p195 = scmp.lt.s32.totalorder %s18, 2
      // Predicated region
      $region21: #{tpu_custom_call.1} parent=5 // pred_check
        %p196 = pneg %p195
      $region22: #{tpu_custom_call.1} parent=5 // pred_check_branch
        %198 = sbr.rel (%p196) target = $region24
      $region23: #{tpu_custom_call.1} parent=5 // pred_region
        // Predicated region
        $region25: #{tpu_custom_call.1} parent=23 // pred_check
          %p199 = pneg %p38
        $region26: #{tpu_custom_call.1} parent=23 // pred_check_branch
          %201 = sbr.rel (%p199) target = $region28
        $region27: #{tpu_custom_call.1} parent=23 // pred_region
          %p202 = scmp.lt.s32.totalorder %s18, 1
          %s203 = scalar_select %p202, %s18, 1
          %s204 = smul.addr %s203, 2
          %s205 = smul.addr %s204, 8
          %s206 = scalar_lea.vmem %s0, %s205
        $region28: #{tpu_custom_call.1} parent=23 // pred_fallthru
          _
        // Predicated region
        $region29: #{tpu_custom_call.1} parent=23 // pred_check
          %p207 = pneg %p64
        $region30: #{tpu_custom_call.1} parent=23 // pred_check_branch
          %209 = sbr.rel (%p207) target = $region32
        $region31: #{tpu_custom_call.1} parent=23 // pred_region
          %p210 = scmp.lt.s32.totalorder %s18, 1
          %s211 = scalar_select %p210, %s18, 1
          %s212 = smul.addr %s211, 2
          %s213 = smul.addr %s212, 8
          %s214 = scalar_lea.vmem %s1, %s213
        $region32: #{tpu_custom_call.1} parent=23 // pred_fallthru
          _
        // Predicated region
        $region33: #{tpu_custom_call.1} parent=23 // pred_check
          %p215 = pneg %p90
        $region34: #{tpu_custom_call.1} parent=23 // pred_check_branch
          %217 = sbr.rel (%p215) target = $region36
        $region35: #{tpu_custom_call.1} parent=23 // pred_region
          %s218 = sand.u32 %s80, 1
          %s219 = scalar_lea.sflag [#allocation3], %s218
          %s220 = sand.u32 %s80, 1
          %s221 = smul.addr %s220, 32
          %s222 = scalar_lea.vmem [#allocation2], %s221
          %s224 = ssub.s32 512, 512
          %225 = vsyncadd %s219, %s224
          %s226 = smul.addr %s18, 4
          %s227 = smul.addr %s226, 128
          %s228 = scalar_lea.hbm %s2, %s227
          %s229 = sshll.u32 %s222, 4
          %s230 = int_to_ptr.vmem [resolvable:$true] %s229
          %235 = dma.hbm_to_vmem [thread:$0]  %s228, 512, %s230, %s219, 256, 256, 16
        $region36: #{tpu_custom_call.1} parent=23 // pred_fallthru
          _
      $region24: #{tpu_custom_call.1} parent=5 // pred_fallthru
        _
      %p236 = scmp.le.s32.totalorder 1, %s18
      %p237 = scmp.lt.s32.totalorder %s18, 3
      %p238 = pnand %p236, %p237
      %p239 = pneg %p238
      // Predicated region
      $region37: #{tpu_custom_call.1} parent=5 // pred_check
        _
      $region38: #{tpu_custom_call.1} parent=5 // pred_check_branch
        %241 = sbr.rel (%p238) target = $region40
      $region39: #{tpu_custom_call.1} parent=5 // pred_region
        %s242 = ssub.s32 %s18, 1
        %s243 = sand.u32 %s83, 1
        %s244 = scalar_lea.sflag [#allocation3], %s243
        %s245 = sand.u32 %s83, 1
        %s246 = smul.addr %s245, 32
        %s247 = scalar_lea.vmem [#allocation2], %s246
        // Predicated region
        $region41: #{tpu_custom_call.1} parent=39 // pred_check
          %p248 = pneg %p96
        $region42: #{tpu_custom_call.1} parent=39 // pred_check_branch
          %250 = sbr.rel (%p248) target = $region44
        $region43: #{tpu_custom_call.1} parent=39 // pred_region
          %251 = dma.done %s244, 512
        $region44: #{tpu_custom_call.1} parent=39 // pred_fallthru
          _
        // Predicated region
        $region45: #{tpu_custom_call.1} parent=39 // pred_check
          %p252 = pneg %p117
        $region46: #{tpu_custom_call.1} parent=39 // pred_check_branch
          %254 = sbr.rel (%p252) target = $region48
        $region47: #{tpu_custom_call.1} parent=39 // pred_region
          %255 = dma.done [#allocation6], 512
        $region48: #{tpu_custom_call.1} parent=39 // pred_fallthru
          _
        %p256 = scmp.lt.s32.totalorder %s23, 1
        %s257 = scalar_select %p256, %s23, 1
        %s258 = smul.addr %s257, 2
        %s259 = smul.addr %s258, 8
        %s260 = scalar_lea.vmem %s0, %s259
        %p261 = pneg %p44
        %p262 = pneg %p41
        %p263 = scmp.lt.s32.totalorder %s23, 1
        %s264 = scalar_select %p263, %s23, 1
        %s265 = smul.addr %s264, 2
        %s266 = smul.addr %s265, 8
        %s267 = scalar_lea.vmem %s1, %s266
        %p268 = pneg %p70
        %p269 = pneg %p67
        %s270 = sand.u32 %s83, 1
        %s271 = scalar_lea.sflag [#allocation3], %s270
        %s272 = sand.u32 %s83, 1
        %s273 = smul.addr %s272, 32
        %s274 = scalar_lea.vmem [#allocation2], %s273
        %p275 = pneg %p96
        %p276 = pneg %p93
        %p277 = pneg %p117
        %p278 = pneg %p114
        %p279 = pneg %p138
        %p280 = pneg %p135
        %p281 = pneg %p164
        %p282 = pneg %p161
        %s283 = sand.u32 %s151, 1
        %s284 = scalar_lea.sflag [#allocation4], %s283
        %s285 = sand.u32 %s151, 1
        %s286 = smul.addr %s285, 32
        %s287 = scalar_lea.vmem [#allocation7], %s286
        %p288 = scmp.lt.s32.totalorder %s23, 1
        %s289 = scalar_select %p288, %s23, 1
        %s290 = smul.addr %s289, 2
        %s291 = smul.addr %s290, 8
        %s292 = scalar_lea.vmem %s0, %s291
        %p293 = scmp.lt.s32.totalorder %s23, 1
        %s294 = scalar_select %p293, %s23, 1
        %s295 = smul.addr %s294, 2
        %s296 = smul.addr %s295, 8
        %s297 = scalar_lea.vmem %s1, %s296
        %v298 = vld [vmem:[%s292] sm:$0xff]
        %v299 = vld [vmem:[%s292 + $0x8] sm:$0xff]
        %v300 = vld [vmem:[#allocation5] sm:$0xff]
        %v301 = vld [vmem:[#allocation5 + $0x8] sm:$0xff]
        %v302 = vld [vmem:[#allocation5 + $0x10] sm:$0xff]
        %v303 = vld [vmem:[#allocation5 + $0x18] sm:$0xff]
        %v304 = vld [vmem:[%s4] sm:$0x3]
        %v306 = vlaneseq
        %v307 = vshrl.u32 %v306, 7
        %v308 = vsub.s32 0, %v307
        %v309 = vrot.slane %v304, %v308
        %v310 = vlaneseq
        %v311 = vshrl.u32 %v310, 7
        %v312 = vsub.s32 1, %v311
        %v313 = vrot.slane %v304, %v312
        %vm316 = vcmask 130048
        %v318 = vsel %vm316, %v298, 0
        %v321 = vsel %vm316, %v299, 0
        %323 = vmatprep.subr.mxu0 %v301
        %324 = vmatpush1.msra.mxu0 %v300
        %325 = vmatprep.subr.mxu0 %v303
        %326 = vmatpush1.msra.mxu0 %v302
        %327 = vmatprep.subr.mxu0 0.0
        %328 = vmatpush1.msra.mxu0 0.0
        %329 = vmatprep.subr.mxu0 0.0
        %330 = vmatpush1.msra.mxu0 0.0
        %331 = vmatprep.subr.mxu0 0.0
        %332 = vmatpush1.msra.mxu0 0.0
        %333 = vmatprep.subr.mxu0 0.0
        %334 = vmatpush1.msra.mxu0 0.0
        %335 = vmatprep.subr.mxu0 0.0
        %336 = vmatpush1.msra.mxu0 0.0
        %337 = vmatprep.subr.mxu0 0.0
        %338 = vmatpush1.msra.mxu0 0.0
        %339 = vmatprep.subr.mxu0 0.0
        %340 = vmatpush1.msra.mxu0 0.0
        %341 = vmatprep.subr.mxu0 0.0
        %342 = vmatpush1.msra.mxu0 0.0
        %343 = vmatprep.subr.mxu0 0.0
        %344 = vmatpush1.msra.mxu0 0.0
        %345 = vmatprep.subr.mxu0 0.0
        %346 = vmatpush1.msra.mxu0 0.0
        %347 = vmatprep.subr.mxu0 0.0
        %348 = vmatpush1.msra.mxu0 0.0
        %349 = vmatprep.subr.mxu0 0.0
        %350 = vmatpush1.msra.mxu0 0.0
        %351 = vmatprep.subr.mxu0 0.0
        %352 = vmatpush1.msra.mxu0 0.0
        %353 = vmatprep.subr.mxu0 0.0
        %354 = vmatpush1.msra.mxu0 0.0
        %355 = vmatprep.subr.mxu0 0.0
        %356 = vmatpush1.msra.mxu0 0.0
        %357 = vmatprep.subr.mxu0 0.0
        %358 = vmatpush1.msra.mxu0 0.0
        %359 = vmatprep.subr.mxu0 0.0
        %360 = vmatpush1.msra.mxu0 0.0
        %361 = vmatprep.subr.mxu0 0.0
        %362 = vmatpush1.msra.mxu0 0.0
        %363 = vmatprep.subr.mxu0 0.0
        %364 = vmatpush1.msra.mxu0 0.0
        %365 = vmatprep.subr.mxu0 0.0
        %366 = vmatpush1.msra.mxu0 0.0
        %367 = vmatprep.subr.mxu0 0.0
        %368 = vmatpush1.msra.mxu0 0.0
        %369 = vmatprep.subr.mxu0 0.0
        %370 = vmatpush1.msra.mxu0 0.0
        %371 = vmatprep.subr.mxu0 0.0
        %372 = vmatpush1.msra.mxu0 0.0
        %373 = vmatprep.subr.mxu0 0.0
        %374 = vmatpush1.msra.mxu0 0.0
        %375 = vmatprep.subr.mxu0 0.0
        %376 = vmatpush1.msra.mxu0 0.0
        %377 = vmatprep.subr.mxu0 0.0
        %378 = vmatpush1.msra.mxu0 0.0
        %379 = vmatprep.subr.mxu0 0.0
        %380 = vmatpush1.msra.mxu0 0.0
        %381 = vmatprep.subr.mxu0 0.0
        %382 = vmatpush1.msra.mxu0 0.0
        %383 = vmatprep.subr.mxu0 0.0
        %384 = vmatpush1.msra.mxu0 0.0
        %385 = vmatprep.subr.mxu0 0.0
        %386 = vmatpush1.msra.mxu0 0.0
        %387 = vmatprep.mubr.f32.mxu0 0.0
        %388 = vmatmul.mubr.f32.gmra.mrb[0].mxu0 %v318
        %v389 = vpop.f32.mrb[0].mxu0
        %v390 = vadd.f32 %v309, %v389
        %v391 = vpop.f32.mrb[0].mxu0
        %v392 = vadd.f32 %v313, %v391
        %393 = vmatprep.mubr.f32.mxu0 0.0
        %394 = vmatmul.mubr.f32.gmra.mrb[0].mxu0 %v321
        %v395 = vpop.f32.mrb[0].mxu0
        %v396 = vadd.f32 %v309, %v395
        %v397 = vpop.f32.mrb[0].mxu0
        %v398 = vadd.f32 %v313, %v397
        %399 = vdwg.mxu0
        %v400 = vld [vmem:[%s297] sm:$0xff]
        %v401 = vld [vmem:[%s297 + $0x8] sm:$0xff]
        %v402 = vld [vmem:[%s247] sm:$0xff]
        %v403 = vld [vmem:[%s247 + $0x8] sm:$0xff]
        %v404 = vld [vmem:[%s247 + $0x10] sm:$0xff]
        %v405 = vld [vmem:[%s247 + $0x18] sm:$0xff]
        %v406 = vadd.f32 %v390, %v402
        %v407 = vadd.f32 %v392, %v403
        %v408 = vadd.f32 %v396, %v404
        %v409 = vadd.f32 %v398, %v405
        %411 = vset.pattern.permute.xlu0 0
        %412 = vperm.xlu0 %411, %v400
        %v413 = vpop.permute.xlu0 %412
        %416 = vset.pattern.permute.xlu0 0
        %417 = vperm.xlu0 %416, %v401
        %v418 = vpop.permute.xlu0 %417
        %v420 = vmul.f32 %v413, %v406
        %v421 = vmul.f32 %v413, %v407
        %v422 = vmul.f32 %v418, %v408
        %v423 = vmul.f32 %v418, %v409
        %424 = vst [vmem:[%s287] sm:$0xff] %v420
        %425 = vst [vmem:[%s287 + $0x8] sm:$0xff] %v421
        %426 = vst [vmem:[%s287 + $0x10] sm:$0xff] %v422
        %427 = vst [vmem:[%s287 + $0x18] sm:$0xff] %v423
        %s428 = sand.u32 %s151, 1
        %s429 = scalar_lea.sflag [#allocation4], %s428
        %s430 = sand.u32 %s151, 1
        %s431 = smul.addr %s430, 32
        %s432 = scalar_lea.vmem [#allocation7], %s431
        // Predicated region
        $region49: #{tpu_custom_call.1} parent=39 // pred_check
          %p433 = pneg %p161
        $region50: #{tpu_custom_call.1} parent=39 // pred_check_branch
          %435 = sbr.rel (%p433) target = $region52
        $region51: #{tpu_custom_call.1} parent=39 // pred_region
          %s437 = ssub.s32 512, 512
          %438 = vsyncadd %s429, %s437
          %s439 = smul.addr %s23, 4
          %s440 = smul.addr %s439, 128
          %s441 = scalar_lea.hbm %s5, %s440
          %s442 = sshll.u32 %s432, 4
          %s443 = int_to_ptr.vmem [resolvable:$true] %s442
          %448 = dma.vmem_to_hbm [thread:$0]  %s443, 512, %s441, %s429, 256, 256, 16
        $region52: #{tpu_custom_call.1} parent=39 // pred_fallthru
          _
      $region40: #{tpu_custom_call.1} parent=5 // pred_fallthru
        _
      %p449 = scmp.le.s32.totalorder 2, %s18
      // Predicated region
      $region53: #{tpu_custom_call.1} parent=5 // pred_check
        %p450 = pneg %p449
      $region54: #{tpu_custom_call.1} parent=5 // pred_check_branch
        %452 = sbr.rel (%p450) target = $region56
      $region55: #{tpu_custom_call.1} parent=5 // pred_region
        %s453 = ssub.s32 %s18, 2
        // Predicated region
        $region57: #{tpu_custom_call.1} parent=55 // pred_check
          %p454 = pneg %p167
        $region58: #{tpu_custom_call.1} parent=55 // pred_check_branch
          %456 = sbr.rel (%p454) target = $region60
        $region59: #{tpu_custom_call.1} parent=55 // pred_region
          %s457 = sand.u32 %s152, 1
          %s458 = scalar_lea.sflag [#allocation4], %s457
          %s459 = sand.u32 %s152, 1
          %s460 = smul.addr %s459, 32
          %s461 = scalar_lea.vmem [#allocation7], %s460
          %462 = dma.done %s458, 512
        $region60: #{tpu_custom_call.1} parent=55 // pred_fallthru
          _
      $region56: #{tpu_custom_call.1} parent=5 // pred_fallthru
        _
    $region6: #{tpu_custom_call.1} parent=1 // loop_footer
      %s22 = sadd.s32 1, %s18
    $region7: #{tpu_custom_call.1} parent=1 // loop_footer_branch
      %17 = sbr.rel target = $region3
    $region8: #{tpu_custom_call.1} parent=1 // loop_exit
      _
    %463 = vsyncpa [#allocation3], 1
    %s464 = scalar_lea.sflag [#allocation3], 1
    %465 = vsyncpa %s464, 1
    %466 = vsyncpa [#allocation6], 1
    %467 = vsyncpa [#allocation4], 1
    %s468 = scalar_lea.sflag [#allocation4], 1
    %469 = vsyncpa %s468, 1

</llo_original>
